<compile_context>
chip_gen: v5e
topology: v5e:2x2
jax: 0.10.0
libtpu: 0.0.40
codegen_flags: <defaults>
</compile_context>

<pallas_src>
import jax
import jax.numpy as jnp
from jax.experimental import pallas as pl
from jax.experimental.pallas import tpu as pltpu


def dqn_kernel(xt_ref, w1t_ref, b1_ref, w2t_ref, b2_ref, o_ref):
    """relu(W1 @ x + b1) -> W2 @ h + b2, batch-on-lanes layout.

    xt_ref : (D_in, TB)    w1t_ref : (H, D_in)    b1_ref : (H, 1)      [f32]
    w2t_ref: (D_out, H)    b2_ref  : (D_out, 1)   o_ref  : (D_out, TB)
    """
    xt = xt_ref[...]
    # First matmul: (H, D_in) @ (D_in, TB) -> (H, TB), f32 MXU accumulation.
    h = jnp.dot(w1t_ref[...], xt, preferred_element_type=jnp.float32)
    h = jnp.maximum(h + b1_ref[...], 0.0)          # bias + ReLU in f32 (VPU)
    # Second matmul: (D_out, H) @ (H, TB) -> (D_out, TB).
    out = jnp.dot(w2t_ref[...], h, preferred_element_type=jnp.float32)
    o_ref[...] = (out + b2_ref[...]).astype(o_ref.dtype)


def _round_up(n: int, m: int) -> int:
    return (n + m - 1) // m * m


def dqn_forward(x, w1, b1, w2, b2, *, no_grid_max_batch=16384, max_batch_tile=16384):
    """Fused DQN forward: relu(x @ w1 + b1) @ w2 + b2.

    x  : (B, d_in)     w1 : (d_in, H)     b1 : (H,)
    w2 : (H, d_out)    b2 : (d_out,)      returns (B, d_out)

    x / w1 / w2 may be f32 or bf16 (bf16 recommended on v6e/v7x for large
    replay batches); accumulation and bias/ReLU math stay in f32.
    """
    B, d_in = x.shape
    hid = w1.shape[1]
    d_out = w2.shape[1]
    out_dtype = x.dtype

    # Lane-dense internal layout: batch -> minor (lane) dimension.
    xt = x.T                                       # (d_in, B)   layout plumbing
    w1t = w1.T                                     # (H, d_in)
    w2t = w2.T                                     # (d_out, H)
    b1c = b1.reshape(hid, 1).astype(jnp.float32)   # column bias, broadcast over lanes
    b2c = b2.reshape(d_out, 1).astype(jnp.float32)

    if B <= no_grid_max_batch:
        # --- Fast path: one invocation, no grid, everything resident in VMEM.
        # Even at the 16384-row cutoff the padded operands are ~1.5 MiB total,
        # far under the default scoped-VMEM limit on every generation.
        vmem = pl.BlockSpec(memory_space=pltpu.MemorySpace.VMEM)
        out_t = pl.pallas_call(
            dqn_kernel,
            out_shape=jax.ShapeDtypeStruct((d_out, B), out_dtype),
            in_specs=[vmem] * 5,
            out_specs=vmem,
        )(xt, w1t, b1c, w2t, b2c)
        return out_t.T

    # --- Large replay batch: tile ONLY the lane/batch axis with big tiles,
    # weights/biases stay resident (constant index_map).  Grid length is >= 2
    # here by construction, so ("parallel",) can shard across v7x's two TCs.
    num_tiles = pl.cdiv(B, max_batch_tile)
    batch_tile = _round_up(pl.cdiv(B, num_tiles), 128)   # lane multiple
    b_pad = num_tiles * batch_tile
    if b_pad != B:
        xt = jnp.pad(xt, ((0, 0), (0, b_pad - B)))       # pad lanes with zeros

    out_t = pl.pallas_call(
        dqn_kernel,
        out_shape=jax.ShapeDtypeStruct((d_out, b_pad), out_dtype),
        grid_spec=pl.GridSpec(
            grid=(num_tiles,),
            in_specs=[
                pl.BlockSpec((d_in, batch_tile), lambda i: (0, i)),  # x^T tile
                pl.BlockSpec((hid, d_in), lambda i: (0, 0)),         # W1^T (resident)
                pl.BlockSpec((hid, 1), lambda i: (0, 0)),            # b1
                pl.BlockSpec((d_out, hid), lambda i: (0, 0)),        # W2^T (resident)
                pl.BlockSpec((d_out, 1), lambda i: (0, 0)),          # b2
            ],
            out_specs=pl.BlockSpec((d_out, batch_tile), lambda i: (0, i)),
        ),
        compiler_params=pltpu.CompilerParams(
            dimension_semantics=("parallel",),
        ),
    )(xt, w1t, b1c, w2t, b2c)
    return out_t[:, :B].T


def init_dqn_params(key, input_layers, output_layers, lanes, max_lane_occupancy):
    """Deterministic synthetic init matching nn.Linear shapes (transposed storage).

    hidden = lanes * max_lane_occupancy
    layer1: Linear(input_layers, hidden)   -> W1 (input_layers, hidden), b1 (hidden,)
    layer2: Linear(hidden, output_layers)  -> W2 (hidden, output_layers), b2 (output_layers,)
    """
    hidden = lanes * max_lane_occupancy
    k1, k2, k3, k4 = jax.random.split(key, 4)
    bound1 = 1.0 / jnp.sqrt(input_layers)
    bound2 = 1.0 / jnp.sqrt(hidden)
    w1 = jax.random.uniform(k1, (input_layers, hidden), jnp.float32, -bound1, bound1)
    b1 = jax.random.uniform(k2, (hidden,), jnp.float32, -bound1, bound1)
    w2 = jax.random.uniform(k3, (hidden, output_layers), jnp.float32, -bound2, bound2)
    b2 = jax.random.uniform(k4, (output_layers,), jnp.float32, -bound2, bound2)
    return w1, b1, w2, b2


if __name__ == "__main__":
    # Shapes implied by the module: input_layers=16, lanes=4,
    # max_lane_occupancy=8 -> hidden=32, output_layers=4, batch=16.
    input_layers = 16
    output_layers = 4
    lanes = 4
    max_lane_occupancy = 8
    batch = 16

    key = jax.random.PRNGKey(0)
    kx, kp, kx2 = jax.random.split(key, 3)
    w1, b1, w2, b2 = init_dqn_params(
        kp, input_layers, output_layers, lanes, max_lane_occupancy
    )

    def ref_fwd(xx):
        return jnp.maximum(xx @ w1 + b1, 0.0) @ w2 + b2

    # 1) Small-batch fast path: single no-grid invocation, VMEM resident.
    x = jax.random.normal(kx, (batch, input_layers), jnp.float32)
    out = jax.block_until_ready(dqn_forward(x, w1, b1, w2, b2))
    assert out.shape == (batch, output_layers)
    assert jnp.allclose(out, ref_fwd(x), atol=1e-5, rtol=1e-5)

    # 2) Large-batch tiled path, exercised with a NON-divisible batch (300) and
    #    small tiles to keep the test cheap (production default tile is 16384).
    x_big = jax.random.normal(kx2, (300, input_layers), jnp.float32)
    out_big = jax.block_until_ready(
        dqn_forward(x_big, w1, b1, w2, b2, no_grid_max_batch=128, max_batch_tile=128)
    )
    assert out_big.shape == (300, output_layers)
    assert jnp.allclose(out_big, ref_fwd(x_big), atol=1e-5, rtol=1e-5)

    print("KERNEL_OK")
</pallas_src>

<mosaic_0001>
module attributes {stable_mosaic.version = 11 : i64} {
  func.func @dqn_kernel(%arg0: memref<16x16xf32, #tpu.memory_space<vmem>>, %arg1: memref<32x16xf32, #tpu.memory_space<vmem>>, %arg2: memref<32x1xf32, #tpu.memory_space<vmem>>, %arg3: memref<4x32xf32, #tpu.memory_space<vmem>>, %arg4: memref<4x1xf32, #tpu.memory_space<vmem>>, %arg5: memref<4x16xf32, #tpu.memory_space<vmem>>) attributes {dimension_semantics = [], scalar_prefetch = 0 : i64, scratch_operands = 0 : i64, tpu.core_type = #tpu.core_type<tc>} {
    %c0 = arith.constant 0 : index
    %c0_0 = arith.constant 0 : index
    %0 = vector.load %arg0[%c0, %c0_0] : memref<16x16xf32, #tpu.memory_space<vmem>>, vector<16x16xf32>
    %c0_1 = arith.constant 0 : index
    %c0_2 = arith.constant 0 : index
    %1 = vector.load %arg1[%c0_1, %c0_2] : memref<32x16xf32, #tpu.memory_space<vmem>>, vector<32x16xf32>
    %cst = arith.constant dense<0.000000e+00> : vector<32x16xf32>
    %2 = tpu.matmul %1, %0, %cst {dimension_numbers = #tpu.dot_dimension_numbers<[1], [0], [0], [1], [0, 0, 1, 1], [], []>} : vector<32x16xf32>, vector<16x16xf32>, vector<32x16xf32> -> vector<32x16xf32>
    %c0_3 = arith.constant 0 : index
    %c0_4 = arith.constant 0 : index
    %3 = vector.load %arg2[%c0_3, %c0_4] : memref<32x1xf32, #tpu.memory_space<vmem>>, vector<32x1xf32>
    %4 = vector.broadcast %3 : vector<32x1xf32> to vector<32x16xf32>
    %5 = arith.addf %2, %4 : vector<32x16xf32>
    %cst_5 = arith.constant 0.000000e+00 : f32
    %6 = vector.broadcast %cst_5 : f32 to vector<32x16xf32>
    %7 = arith.maximumf %5, %6 : vector<32x16xf32>
    %c0_6 = arith.constant 0 : index
    %c0_7 = arith.constant 0 : index
    %8 = vector.load %arg3[%c0_6, %c0_7] : memref<4x32xf32, #tpu.memory_space<vmem>>, vector<4x32xf32>
    %cst_8 = arith.constant dense<0.000000e+00> : vector<4x16xf32>
    %9 = tpu.matmul %8, %7, %cst_8 {dimension_numbers = #tpu.dot_dimension_numbers<[1], [0], [0], [1], [0, 0, 1, 1], [], []>} : vector<4x32xf32>, vector<32x16xf32>, vector<4x16xf32> -> vector<4x16xf32>
    %c0_9 = arith.constant 0 : index
    %c0_10 = arith.constant 0 : index
    %10 = vector.load %arg4[%c0_9, %c0_10] : memref<4x1xf32, #tpu.memory_space<vmem>>, vector<4x1xf32>
    %11 = vector.broadcast %10 : vector<4x1xf32> to vector<4x16xf32>
    %12 = arith.addf %9, %11 : vector<4x16xf32>
    %c0_11 = arith.constant 0 : index
    %c0_12 = arith.constant 0 : index
    %13 = vector.load %arg5[%c0_11, %c0_12] : memref<4x16xf32, #tpu.memory_space<vmem>>, vector<4x16xf32>
    tpu.vector_store %arg5[%c0_11, %c0_12], %12 {strides = array<i32>} : memref<4x16xf32, #tpu.memory_space<vmem>>, vector<4x16xf32>,
    return
  }
}

</mosaic_0001>

<llo_original>
// kernel: tpu_custom_call.1
$region0: #{tpu_custom_call.1}
  #allocation0 [shape = 'u32[]', space=smem, size = 0x4, offset = 0x4, fixed_abs, tag = 'smem constant byte address 0x4 - core index']
  #allocation1 [shape = 'u32[72,128]{1,0:T(1,128)}', space=vmem, size = 0x9000, scoped, tag = 'internal scratch']
  %s0 = inlined_call_operand.vmem [shape: f32[16,16], index: 0, kind: input, shape index: {}]
  %s1 = inlined_call_operand.vmem [shape: f32[32,16], index: 1, kind: input, shape index: {}]
  %s2 = inlined_call_operand.vmem [shape: f32[32,1], index: 2, kind: input, shape index: {}]
  %s3 = inlined_call_operand.vmem [shape: f32[4,32], index: 3, kind: input, shape index: {}]
  %s4 = inlined_call_operand.vmem [shape: f32[4,1], index: 4, kind: input, shape index: {}]
  %s5 = inlined_call_operand.hbm [shape: f32[4,16], index: 5, kind: output, shape index: {}]
  %s6 = sld [smem:[#allocation0]]
  $region30: #{tpu_custom_call.1} parent=0
    _
  %s8 = ssub.s32 1, %s6
  %s9 = scalar_select 0, %s8, %s6
  $region1: #{tpu_custom_call.1} parent=0
    #allocation2 [shape = 'u8[2048]{0}', space=vmem, size = 0x800, scoped, tag = 'output window, operand 0, single buffered']
    #allocation3 [shape = 's32[1]{0}', space=sflag, size = 0x4, scoped, tag = 'scoped memory for tpu_custom_call.1']
    %10 = vsyncpa [#allocation3], 0
    // Predicated region
    $region2: #{tpu_custom_call.1} parent=1 // pred_check
      _
    $region3: #{tpu_custom_call.1} parent=1 // pred_check_branch
      %12 = sbr.rel (0) target = $region5
    $region4: #{tpu_custom_call.1} parent=1 // pred_region
      _
    $region5: #{tpu_custom_call.1} parent=1 // pred_fallthru
      _
    // Predicated region
    $region6: #{tpu_custom_call.1} parent=1 // pred_check
      _
    $region7: #{tpu_custom_call.1} parent=1 // pred_check_branch
      %14 = sbr.rel (0) target = $region9
    $region8: #{tpu_custom_call.1} parent=1 // pred_region
      _
    $region9: #{tpu_custom_call.1} parent=1 // pred_fallthru
      _
    // Predicated region
    $region10: #{tpu_custom_call.1} parent=1 // pred_check
      _
    $region11: #{tpu_custom_call.1} parent=1 // pred_check_branch
      %16 = sbr.rel (0) target = $region13
    $region12: #{tpu_custom_call.1} parent=1 // pred_region
      _
    $region13: #{tpu_custom_call.1} parent=1 // pred_fallthru
      _
    // Predicated region
    $region14: #{tpu_custom_call.1} parent=1 // pred_check
      _
    $region15: #{tpu_custom_call.1} parent=1 // pred_check_branch
      %18 = sbr.rel (0) target = $region17
    $region16: #{tpu_custom_call.1} parent=1 // pred_region
      _
    $region17: #{tpu_custom_call.1} parent=1 // pred_fallthru
      _
    // Predicated region
    $region18: #{tpu_custom_call.1} parent=1 // pred_check
      _
    $region19: #{tpu_custom_call.1} parent=1 // pred_check_branch
      %20 = sbr.rel (0) target = $region21
    $region20: #{tpu_custom_call.1} parent=1 // pred_region
      _
    $region21: #{tpu_custom_call.1} parent=1 // pred_fallthru
      _
    %v21 = vld [vmem:[%s0] sm:$0xff]
    %v22 = vld [vmem:[%s0 + $0x8] sm:$0xff]
    %v23 = vld [vmem:[%s1] sm:$0xff]
    %v24 = vld [vmem:[%s1 + $0x8] sm:$0xff]
    %v25 = vld [vmem:[%s1 + $0x10] sm:$0xff]
    %v26 = vld [vmem:[%s1 + $0x18] sm:$0xff]
    %v27 = vld [vmem:[%s2] sm:$0xff]
    %v28 = vld [vmem:[%s2 + $0x8] sm:$0xff]
    %v29 = vld [vmem:[%s2 + $0x10] sm:$0xff]
    %v30 = vld [vmem:[%s2 + $0x18] sm:$0xff]
    %32 = vset.pattern.permute.xlu0 0
    %33 = vperm.xlu0 %32, %v27
    %v34 = vpop.permute.xlu0 %33
    %37 = vset.pattern.permute.xlu0 0
    %38 = vperm.xlu0 %37, %v28
    %v39 = vpop.permute.xlu0 %38
    %42 = vset.pattern.permute.xlu0 0
    %43 = vperm.xlu0 %42, %v29
    %v44 = vpop.permute.xlu0 %43
    %47 = vset.pattern.permute.xlu0 0
    %48 = vperm.xlu0 %47, %v30
    %v49 = vpop.permute.xlu0 %48
    %vm51 = vcmask 130048
    %v53 = vsel %vm51, %v23, 0
    %v56 = vsel %vm51, %v24, 0
    %v59 = vsel %vm51, %v25, 0
    %v62 = vsel %vm51, %v26, 0
    %64 = vmatpush.msra.mxu0 0.0
    %65 = vmatpush.msra.mxu0 0.0
    %66 = vmatpush.msra.mxu0 0.0
    %67 = vmatpush.msra.mxu0 0.0
    %68 = vmatpush.msra.mxu0 0.0
    %69 = vmatpush.msra.mxu0 0.0
    %70 = vmatpush.msra.mxu0 0.0
    %71 = vmatpush.msra.mxu0 0.0
    %72 = vmatpush.msra.mxu0 0.0
    %73 = vmatpush.msra.mxu0 0.0
    %74 = vmatpush.msra.mxu0 0.0
    %75 = vmatpush.msra.mxu0 0.0
    %76 = vmatpush.msra.mxu0 0.0
    %77 = vmatpush.msra.mxu0 0.0
    %78 = vmatpush.msra.mxu0 %v22
    %79 = vmatpush.msra.mxu0 %v21
    %80 = vmatmul.f32.gmra.mxu0 %v53
    %v81 = vpop.f32.mrf.mxu0
    %v82 = vadd.f32 %v34, %v81
    %83 = vmatmul.f32.gmra.mxu0 %v56
    %v84 = vpop.f32.mrf.mxu0
    %v85 = vadd.f32 %v39, %v84
    %86 = vmatmul.f32.gmra.mxu0 %v59
    %v87 = vpop.f32.mrf.mxu0
    %v88 = vadd.f32 %v44, %v87
    %89 = vmatmul.f32.gmra.mxu0 %v62
    %v90 = vpop.f32.mrf.mxu0
    %v91 = vadd.f32 %v49, %v90
    %92 = vdwg.mxu0
    %v93 = vmax.f32 %v82, 0.0
    %v94 = vmax.f32 %v85, 0.0
    %v95 = vmax.f32 %v88, 0.0
    %v96 = vmax.f32 %v91, 0.0
    %v97 = vld [vmem:[%s3] sm:$0xf]
    %v98 = vld [vmem:[%s4] sm:$0xf]
    %100 = vset.pattern.permute.xlu0 0
    %101 = vperm.xlu0 %100, %v98
    %v102 = vpop.permute.xlu0 %101
    %vm104 = vcmask 261120
    %v106 = vsel %vm104, %v97, 0
    %108 = vmatpush.msra.mxu0 0.0
    %109 = vmatpush.msra.mxu0 0.0
    %110 = vmatpush.msra.mxu0 0.0
    %111 = vmatpush.msra.mxu0 0.0
    %112 = vmatpush.msra.mxu0 0.0
    %113 = vmatpush.msra.mxu0 0.0
    %114 = vmatpush.msra.mxu0 0.0
    %115 = vmatpush.msra.mxu0 0.0
    %116 = vmatpush.msra.mxu0 0.0
    %117 = vmatpush.msra.mxu0 0.0
    %118 = vmatpush.msra.mxu0 0.0
    %119 = vmatpush.msra.mxu0 0.0
    %120 = vmatpush.msra.mxu0 %v96
    %121 = vmatpush.msra.mxu0 %v95
    %122 = vmatpush.msra.mxu0 %v94
    %123 = vmatpush.msra.mxu0 %v93
    %124 = vmatmul.f32.gmra.mxu0 %v106
    %v125 = vpop.f32.mrf.mxu0
    %v126 = vadd.f32 %v102, %v125
    %127 = vdwg.mxu0
    %vm128 = vcmask 125952
    %129 = vst.msk [vmem:[#allocation2] sm:$0xf] %vm128, %v126
    // Predicated region
    $region22: #{tpu_custom_call.1} parent=1 // pred_check
      _
    $region23: #{tpu_custom_call.1} parent=1 // pred_check_branch
      %131 = sbr.rel (0) target = $region25
    $region24: #{tpu_custom_call.1} parent=1 // pred_region
      %133 = vsyncadd [#allocation3], 0
      %s135 = sshll.u32 [#allocation2], 4
      %s136 = int_to_ptr.vmem [resolvable:$true] %s135
      %s137 = sshll.u32 %s5, 4
      %s138 = int_to_ptr.hbm [resolvable:$true] %s137
      %140 = dma.vmem_to_hbm [thread:$0]  %s136, 64, %s138, [#allocation3]
    $region25: #{tpu_custom_call.1} parent=1 // pred_fallthru
      _
    // Predicated region
    $region26: #{tpu_custom_call.1} parent=1 // pred_check
      _
    $region27: #{tpu_custom_call.1} parent=1 // pred_check_branch
      %142 = sbr.rel (0) target = $region29
    $region28: #{tpu_custom_call.1} parent=1 // pred_region
      %144 = dma.done [#allocation3], 64
    $region29: #{tpu_custom_call.1} parent=1 // pred_fallthru
      _
    %145 = vsyncpa [#allocation3], 1

</llo_original>
